<compile_context>
chip_gen: v5e
topology: v5e:2x2
jax: 0.10.0
libtpu: 0.0.40
codegen_flags: <defaults>
</compile_context>

<pallas_src>
import jax
import jax.numpy as jnp
from jax.experimental import pallas as pl
from jax.experimental.pallas import tpu as pltpu

_LANE = 128
_BLOCK_BYTES = 4 * 1024 * 1024  # ~4 MiB per buffer; x2 double-buffer, x2 in+out = ~16 MiB VMEM


def _sublane_pack(dtype) -> int:
    """Sublane packing factor: 8 for 4-byte, 16 for 2-byte, 32 for 1-byte dtypes."""
    itemsize = jnp.dtype(dtype).itemsize
    return max(8, 32 // max(1, itemsize))


def _swish_kernel(x_ref, o_ref):
    # Compute in f32 (exact no-op for f32; safe on v5e which lacks bf16 VPU/EUP).
    x = x_ref[...].astype(jnp.float32)
    # sigmoid(x) = 0.5 * (tanh(0.5 * x) + 1): one EUP push, exact, no overflow.
    sig = 0.5 * (jnp.tanh(0.5 * x) + 1.0)
    o_ref[...] = (x * sig).astype(o_ref.dtype)


def _swish_jnp(x):
    """Pure-JAX swish with the same numerics as the kernel (for tiny tails)."""
    xf = x.astype(jnp.float32)
    return (xf * (0.5 * (jnp.tanh(0.5 * xf) + 1.0))).astype(x.dtype)


@jax.jit
def swish(x):
    """Elementwise swish: x * sigmoid(x). Works for any shape/dtype."""
    orig_shape = x.shape
    orig_dtype = x.dtype
    n = x.size

    x_flat = jnp.ravel(x)
    tail = n % _LANE
    n_main = n - tail

    if n_main == 0:
        # Fewer than 128 elements: not worth a kernel launch.
        return _swish_jnp(x_flat).reshape(orig_shape)

    rows = n_main // _LANE
    x2d = x_flat[:n_main].reshape(rows, _LANE)

    pack = _sublane_pack(orig_dtype)
    itemsize = jnp.dtype(orig_dtype).itemsize
    budget_rows = max(pack, _BLOCK_BYTES // (_LANE * itemsize))

    if rows <= 2 * pack:
        # Tiny input: one block equal to the full array (always legal).
        block_rows = rows
        grid = (1,)
    else:
        # Pick an even number of grid steps (balanced work across v7x's two
        # TensorCores), with each block at most ~_BLOCK_BYTES per buffer.
        steps = max(2, pl.cdiv(rows, budget_rows))
        if steps % 2:
            steps += 1
        block_rows = pl.cdiv(rows, steps)
        # Round up to the dtype's sublane pack so every block (and the
        # packed-sublane layout of the ragged last block) stays aligned.
        block_rows = max(pack, pl.cdiv(block_rows, pack) * pack)
        grid = (pl.cdiv(rows, block_rows),)

    out2d = pl.pallas_call(
        _swish_kernel,
        out_shape=jax.ShapeDtypeStruct((rows, _LANE), orig_dtype),
        grid_spec=pltpu.PrefetchScalarGridSpec(
            num_scalar_prefetch=0,
            grid=grid,
            in_specs=[pl.BlockSpec((block_rows, _LANE), lambda i: (i, 0))],
            out_specs=pl.BlockSpec((block_rows, _LANE), lambda i: (i, 0)),
        ),
        compiler_params=pltpu.CompilerParams(
            dimension_semantics=("parallel",),
            # ~16 MiB of double-buffered in+out blocks plus headroom; above
            # v5e's 16 MiB scoped default, well under every generation's
            # physical VMEM (v7x: 64 MiB, v5e/v6e: 128 MiB).
            vmem_limit_bytes=48 * 1024 * 1024,
        ),
    )(x2d)

    out_flat = out2d.reshape(-1)
    if tail:
        # Handle the <128-element tail in plain JAX (no padded HBM copy of x).
        out_flat = jnp.concatenate([out_flat, _swish_jnp(x_flat[n_main:])])
    return out_flat.reshape(orig_shape)


if __name__ == "__main__":
    key = jax.random.PRNGKey(0)
    # NCHW input, matching the PyTorch convention of the repo's layers.
    x = jax.random.normal(key, (2, 4, 16, 16), dtype=jnp.float32)

    y = swish(x)
    jax.block_until_ready(y)

    # Correctness check against a pure-JAX reference.  The tanh-based sigmoid
    # is exact, so a tight tolerance holds.
    y_ref = x * jax.nn.sigmoid(x)
    assert y.shape == x.shape and y.dtype == x.dtype
    assert jnp.allclose(y, y_ref, atol=1e-5, rtol=1e-5)

    print("KERNEL_OK")
</pallas_src>

<mosaic_0001>
module attributes {stable_mosaic.version = 11 : i64} {
  func.func @_swish_kernel(%arg0: i32, %arg1: memref<16x128xf32, #tpu.memory_space<vmem>>, %arg2: memref<16x128xf32, #tpu.memory_space<vmem>>) attributes {dimension_semantics = [#tpu.dimension_semantics<parallel>], iteration_bounds = array<i64: 1>, scalar_prefetch = 0 : i64, scratch_operands = 0 : i64, tpu.core_type = #tpu.core_type<tc>, window_params = [{transform_indices = @transform_0, window_bounds = array<i64: 16, 128>}, {transform_indices = @transform_1, window_bounds = array<i64: 16, 128>}]} {
    %c0 = arith.constant 0 : index
    %c0_0 = arith.constant 0 : index
    %0 = vector.load %arg1[%c0, %c0_0] : memref<16x128xf32, #tpu.memory_space<vmem>>, vector<16x128xf32>
    %cst = arith.constant 5.000000e-01 : f32
    %1 = vector.broadcast %cst : f32 to vector<16x128xf32>
    %2 = arith.mulf %1, %0 : vector<16x128xf32>
    %3 = math.tanh %2 : vector<16x128xf32>
    %cst_1 = arith.constant 1.000000e+00 : f32
    %4 = vector.broadcast %cst_1 : f32 to vector<16x128xf32>
    %5 = arith.addf %3, %4 : vector<16x128xf32>
    %cst_2 = arith.constant 5.000000e-01 : f32
    %6 = vector.broadcast %cst_2 : f32 to vector<16x128xf32>
    %7 = arith.mulf %6, %5 : vector<16x128xf32>
    %8 = arith.mulf %0, %7 : vector<16x128xf32>
    %c0_3 = arith.constant 0 : index
    %c0_4 = arith.constant 0 : index
    %9 = vector.load %arg2[%c0_3, %c0_4] : memref<16x128xf32, #tpu.memory_space<vmem>>, vector<16x128xf32>
    tpu.vector_store %arg2[%c0_3, %c0_4], %8 {strides = array<i32>} : memref<16x128xf32, #tpu.memory_space<vmem>>, vector<16x128xf32>,
    return
  }
  func.func @transform_0(%arg0: i32) -> (i32, i32) {
    %c0_i32 = arith.constant 0 : i32
    %c0_i32_0 = arith.constant 0 : i32
    return %arg0, %c0_i32 : i32, i32
  }
  func.func @transform_1(%arg0: i32) -> (i32, i32) {
    %c0_i32 = arith.constant 0 : i32
    %c0_i32_0 = arith.constant 0 : i32
    return %arg0, %c0_i32 : i32, i32
  }
}

</mosaic_0001>

<llo_original>
// kernel: swish.1
$region0: #{swish.1}
  #allocation0 [shape = 'u32[]', space=smem, size = 0x4, offset = 0x4, fixed_abs, tag = 'smem constant byte address 0x4 - core index']
  #allocation1 [shape = 'u32[72,128]{1,0:T(1,128)}', space=vmem, size = 0x9000, scoped, tag = 'internal scratch']
  %s0 = inlined_call_operand.vmem [shape: f32[16,128], index: 0, kind: input, shape index: {}]
  %s1 = inlined_call_operand.vmem [shape: f32[16,128], index: 1, kind: output, shape index: {}]
  %s2 = sld [smem:[#allocation0]]
  $region14: #{swish.1} parent=0
    _
  %s4 = ssub.s32 1, %s2
  %s5 = scalar_select 0, %s4, %s2
  // Predicated region
  $region2: #{swish.1} parent=0 // pred_check
    _
  $region3: #{swish.1} parent=0 // pred_check_branch
    %7 = sbr.rel (0) target = $region5
  $region4: #{swish.1} parent=0 // pred_region
    _
  $region5: #{swish.1} parent=0 // pred_fallthru
    _
  %v8 = vld [vmem:[%s0] sm:$0xff]
  %v9 = vld [vmem:[%s0 + $0x8] sm:$0xff]
  %v10 = vmul.f32 %v8, 0.5
  %v11 = vmul.f32 %v9, 0.5
  %v12 = vtanh.pop %v10
  %v13 = vtanh.pop %v11
  %v14 = vadd.f32 %v12, 1.0
  %v15 = vadd.f32 %v13, 1.0
  %v16 = vmul.f32 %v14, 0.5
  %v17 = vmul.f32 %v15, 0.5
  %v18 = vmul.f32 %v8, %v16
  %v19 = vmul.f32 %v9, %v17
  %20 = vst [vmem:[%s1] sm:$0xff] %v18
  %21 = vst [vmem:[%s1 + $0x8] sm:$0xff] %v19
  // Predicated region
  $region6: #{swish.1} parent=0 // pred_check
    _
  $region7: #{swish.1} parent=0 // pred_check_branch
    %23 = sbr.rel (0) target = $region9
  $region8: #{swish.1} parent=0 // pred_region
    _
  $region9: #{swish.1} parent=0 // pred_fallthru
    _
  // Predicated region
  $region10: #{swish.1} parent=0 // pred_check
    _
  $region11: #{swish.1} parent=0 // pred_check_branch
    %25 = sbr.rel (0) target = $region13
  $region12: #{swish.1} parent=0 // pred_region
    _
  $region13: #{swish.1} parent=0 // pred_fallthru
    _

</llo_original>
